<compile_context>
chip_gen: v5e
topology: v5e:2x2
jax: 0.10.0
libtpu: 0.0.40
codegen_flags: <defaults>
</compile_context>

<pallas_src>
import numpy as np

import jax
import jax.numpy as jnp
from jax.experimental import pallas as pl
from jax.experimental.pallas import tpu as pltpu


# ----------------------------------------------------------------------------
# Host-side construction of the banded averaging matrix.
# ----------------------------------------------------------------------------
def _build_avg_matrix(L, kernel_size, stride=1):
    """(Lout, L) f32 matrix: out = W @ x  <=>  replicate-pad + AvgPool1d(k, s).

    Padding convention matches the PyTorch module exactly:
      front = k // 2   (same as (k-1)//2 for odd k), end = (k - 1) // 2.
    """
    front = kernel_size // 2
    end = (kernel_size - 1) // 2
    Lp = L + front + end
    Lout = (Lp - kernel_size) // stride + 1
    W = np.zeros((Lout, L), dtype=np.float32)
    inv_k = 1.0 / float(kernel_size)
    for t in range(Lout):
        for p in range(t * stride, t * stride + kernel_size):
            j = min(max(p - front, 0), L - 1)   # replicate padding -> clip
            W[t, j] += inv_k
    return jnp.asarray(W)


# ----------------------------------------------------------------------------
# Kernels.
# ----------------------------------------------------------------------------
def _moving_avg_kernel(w_ref, x_ref, o_ref):
    """o[b] = W @ x[b] for every batch element in the block (MXU matmuls)."""
    w = w_ref[...]                                        # (Lout, L) f32, resident
    tb = x_ref.shape[0]
    for b in range(tb):                                   # small static unroll
        xb = x_ref[b].astype(jnp.float32)                 # (L, C)
        yb = jnp.dot(w, xb, preferred_element_type=jnp.float32)  # (Lout, C)
        o_ref[b] = yb.astype(o_ref.dtype)


def _series_decomp_kernel(w_ref, x_ref, res_ref, trend_ref):
    """Fused decomposition (stride=1): trend = W @ x, res = x - trend."""
    w = w_ref[...]                                        # (L, L) f32
    tb = x_ref.shape[0]
    for b in range(tb):
        xb = x_ref[b].astype(jnp.float32)                 # (L, C)
        tr = jnp.dot(w, xb, preferred_element_type=jnp.float32)
        trend_ref[b] = tr.astype(trend_ref.dtype)
        res_ref[b] = (xb - tr).astype(res_ref.dtype)


# ----------------------------------------------------------------------------
# Tile selection.
# ----------------------------------------------------------------------------
def _pick_batch_tile(B, L, Lout, C, itemsize, *, n_out=1,
                     budget_bytes=20 * 2**20, max_unroll=256):
    """Largest batch block that fits a conservative VMEM budget.

    Accounts for: double-buffered input/output wire blocks plus the in-kernel
    f32 working copies (x cast + matmul result) per batch element, and the
    (Lout, L) f32 weight matrix. cdiv grid -> no divisor restriction; a single
    big step is preferred over many tiny ones (per-step overhead dominates at
    LTSF sizes).
    """
    w_bytes = 2 * Lout * L * 4                     # weight (generously double-buffered)
    per_b_in = (2 * itemsize + 4) * L * C          # 2x wire (db) + f32 copy
    per_b_out = n_out * (2 * itemsize + 4) * Lout * C
    per_b = max(1, per_b_in + per_b_out)
    avail = max(per_b, budget_bytes - w_bytes)
    tb = max(1, avail // per_b)
    tb = min(tb, B, max_unroll)
    return int(tb)


_COMPILER_PARAMS = pltpu.CompilerParams(
    dimension_semantics=("parallel",),
    vmem_limit_bytes=32 * 1024 * 1024,
)
# NOTE: on v7x a second parallel grid axis over C (blocks of 128) would expose
# both TensorCores when C is large; enc_in in this model is small, so the
# single batch axis is kept.


# ----------------------------------------------------------------------------
# Public wrappers (torch-forward-compatible, [B, L, C] layout throughout).
# ----------------------------------------------------------------------------
def moving_avg(x, kernel_size, stride=1):
    """x: [B, L, C] -> replicate-padded moving average over time, [B, Lout, C]."""
    B, L, C = x.shape
    W = _build_avg_matrix(L, kernel_size, stride)
    Lout = W.shape[0]
    itemsize = jnp.dtype(x.dtype).itemsize
    tb = _pick_batch_tile(B, L, Lout, C, itemsize, n_out=1)

    return pl.pallas_call(
        _moving_avg_kernel,
        out_shape=jax.ShapeDtypeStruct((B, Lout, C), x.dtype),
        grid_spec=pltpu.PrefetchScalarGridSpec(
            num_scalar_prefetch=0,
            grid=(pl.cdiv(B, tb),),
            in_specs=[
                pl.BlockSpec((Lout, L), lambda b: (0, 0)),      # W, loaded once
                pl.BlockSpec((tb, L, C), lambda b: (b, 0, 0)),  # x batch block
            ],
            out_specs=pl.BlockSpec((tb, Lout, C), lambda b: (b, 0, 0)),
        ),
        compiler_params=_COMPILER_PARAMS,
    )(W, x)


def series_decomp(x, kernel_size):
    """Fused series decomposition (stride=1): returns (res, moving_mean)."""
    B, L, C = x.shape
    W = _build_avg_matrix(L, kernel_size, stride=1)       # (L, L)
    itemsize = jnp.dtype(x.dtype).itemsize
    tb = _pick_batch_tile(B, L, L, C, itemsize, n_out=2)

    res, trend = pl.pallas_call(
        _series_decomp_kernel,
        out_shape=(
            jax.ShapeDtypeStruct((B, L, C), x.dtype),
            jax.ShapeDtypeStruct((B, L, C), x.dtype),
        ),
        grid_spec=pltpu.PrefetchScalarGridSpec(
            num_scalar_prefetch=0,
            grid=(pl.cdiv(B, tb),),
            in_specs=[
                pl.BlockSpec((L, L), lambda b: (0, 0)),
                pl.BlockSpec((tb, L, C), lambda b: (b, 0, 0)),
            ],
            out_specs=(
                pl.BlockSpec((tb, L, C), lambda b: (b, 0, 0)),
                pl.BlockSpec((tb, L, C), lambda b: (b, 0, 0)),
            ),
        ),
        compiler_params=_COMPILER_PARAMS,
    )(W, x)
    return res, trend


# ----------------------------------------------------------------------------
# Pure-JAX reference mirroring the PyTorch forward exactly.
# ----------------------------------------------------------------------------
def _moving_avg_ref(x, kernel_size, stride):
    x = jnp.asarray(x, jnp.float32)
    front_n = kernel_size // 2 if kernel_size % 2 == 0 else (kernel_size - 1) // 2
    end_n = (kernel_size - 1) // 2
    front = jnp.repeat(x[:, 0:1, :], front_n, axis=1)
    end = jnp.repeat(x[:, -1:, :], end_n, axis=1)
    xp = jnp.concatenate([front, x, end], axis=1)
    Lp = xp.shape[1]
    out_len = (Lp - kernel_size) // stride + 1
    windows = jnp.stack(
        [xp[:, t * stride: t * stride + kernel_size, :] for t in range(out_len)],
        axis=1,
    )  # [B, Lout, k, C]
    return jnp.mean(windows, axis=2)


if __name__ == "__main__":
    key = jax.random.PRNGKey(0)

    # (kernel_size, stride, B, L, C)
    configs = [
        (5, 1, 2, 16, 8),   # odd kernel (module's use-case shape class)
        (4, 1, 4, 24, 8),   # even-kernel padding convention
        (7, 2, 2, 16, 8),   # stride > 1 (folded into the averaging matrix)
    ]
    for i, (k, s, B, L, C) in enumerate(configs):
        key, sub = jax.random.split(key)
        x = jax.random.normal(sub, (B, L, C), dtype=jnp.float32)
        out = jax.block_until_ready(moving_avg(x, k, s))
        ref = _moving_avg_ref(x, k, s)
        assert out.shape == ref.shape, (i, out.shape, ref.shape)
        assert jnp.allclose(out, ref, atol=1e-5, rtol=1e-5), f"mismatch in config {i}"

    # Fused series decomposition (what Model.tsr_decomp actually calls).
    key, sub = jax.random.split(key)
    x = jax.random.normal(sub, (2, 16, 8), dtype=jnp.float32)
    res, trend = jax.block_until_ready(series_decomp(x, 5))
    trend_ref = _moving_avg_ref(x, 5, 1)
    assert jnp.allclose(trend, trend_ref, atol=1e-5, rtol=1e-5), "decomp trend mismatch"
    assert jnp.allclose(res, x - trend_ref, atol=1e-5, rtol=1e-5), "decomp residual mismatch"

    print("KERNEL_OK")
</pallas_src>

<mosaic_0001>
module attributes {stable_mosaic.version = 11 : i64} {
  func.func @_moving_avg_kernel(%arg0: i32, %arg1: memref<16x16xf32, #tpu.memory_space<vmem>>, %arg2: memref<2x16x8xf32, #tpu.memory_space<vmem>>, %arg3: memref<2x16x8xf32, #tpu.memory_space<vmem>>) attributes {dimension_semantics = [#tpu.dimension_semantics<parallel>], iteration_bounds = array<i64: 1>, scalar_prefetch = 0 : i64, scratch_operands = 0 : i64, tpu.core_type = #tpu.core_type<tc>, window_params = [{pipeline_mode = #tpu.pipeline_mode<synchronous>, transform_indices = @transform_0, window_bounds = array<i64: 16, 16>}, {transform_indices = @transform_1, window_bounds = array<i64: 2, 16, 8>}, {transform_indices = @transform_2, window_bounds = array<i64: 2, 16, 8>}]} {
    %c0 = arith.constant 0 : index
    %c0_0 = arith.constant 0 : index
    %0 = vector.load %arg1[%c0, %c0_0] : memref<16x16xf32, #tpu.memory_space<vmem>>, vector<16x16xf32>
    %c0_1 = arith.constant 0 : index
    %c0_2 = arith.constant 0 : index
    %c0_3 = arith.constant 0 : index
    %1 = vector.load %arg2[%c0_1, %c0_2, %c0_3] : memref<2x16x8xf32, #tpu.memory_space<vmem>>, vector<1x16x8xf32>
    %2 = vector.shape_cast %1 : vector<1x16x8xf32> to vector<16x8xf32>
    %cst = arith.constant dense<0.000000e+00> : vector<16x8xf32>
    %3 = tpu.matmul %0, %2, %cst {dimension_numbers = #tpu.dot_dimension_numbers<[1], [0], [0], [1], [0, 0, 1, 1], [], []>} : vector<16x16xf32>, vector<16x8xf32>, vector<16x8xf32> -> vector<16x8xf32>
    %c0_4 = arith.constant 0 : index
    %c0_5 = arith.constant 0 : index
    %c0_6 = arith.constant 0 : index
    %4 = vector.load %arg3[%c0_4, %c0_5, %c0_6] : memref<2x16x8xf32, #tpu.memory_space<vmem>>, vector<1x16x8xf32>
    %5 = vector.shape_cast %4 : vector<1x16x8xf32> to vector<16x8xf32>
    %6 = vector.shape_cast %3 : vector<16x8xf32> to vector<1x16x8xf32>
    tpu.vector_store %arg3[%c0_4, %c0_5, %c0_6], %6 {strides = array<i32>} : memref<2x16x8xf32, #tpu.memory_space<vmem>>, vector<1x16x8xf32>,
    %c1 = arith.constant 1 : index
    %c0_7 = arith.constant 0 : index
    %c0_8 = arith.constant 0 : index
    %7 = vector.load %arg2[%c1, %c0_7, %c0_8] : memref<2x16x8xf32, #tpu.memory_space<vmem>>, vector<1x16x8xf32>
    %8 = vector.shape_cast %7 : vector<1x16x8xf32> to vector<16x8xf32>
    %cst_9 = arith.constant dense<0.000000e+00> : vector<16x8xf32>
    %9 = tpu.matmul %0, %8, %cst_9 {dimension_numbers = #tpu.dot_dimension_numbers<[1], [0], [0], [1], [0, 0, 1, 1], [], []>} : vector<16x16xf32>, vector<16x8xf32>, vector<16x8xf32> -> vector<16x8xf32>
    %c1_10 = arith.constant 1 : index
    %c0_11 = arith.constant 0 : index
    %c0_12 = arith.constant 0 : index
    %10 = vector.load %arg3[%c1_10, %c0_11, %c0_12] : memref<2x16x8xf32, #tpu.memory_space<vmem>>, vector<1x16x8xf32>
    %11 = vector.shape_cast %10 : vector<1x16x8xf32> to vector<16x8xf32>
    %12 = vector.shape_cast %9 : vector<16x8xf32> to vector<1x16x8xf32>
    tpu.vector_store %arg3[%c1_10, %c0_11, %c0_12], %12 {strides = array<i32>} : memref<2x16x8xf32, #tpu.memory_space<vmem>>, vector<1x16x8xf32>,
    return
  }
  func.func @transform_0(%arg0: i32) -> (i32, i32) {
    %c0_i32 = arith.constant 0 : i32
    %c0_i32_0 = arith.constant 0 : i32
    %c0_i32_1 = arith.constant 0 : i32
    return %c0_i32, %c0_i32_0 : i32, i32
  }
  func.func @transform_1(%arg0: i32) -> (i32, i32, i32) {
    %c0_i32 = arith.constant 0 : i32
    %c0_i32_0 = arith.constant 0 : i32
    %c0_i32_1 = arith.constant 0 : i32
    return %arg0, %c0_i32, %c0_i32_0 : i32, i32, i32
  }
  func.func @transform_2(%arg0: i32) -> (i32, i32, i32) {
    %c0_i32 = arith.constant 0 : i32
    %c0_i32_0 = arith.constant 0 : i32
    %c0_i32_1 = arith.constant 0 : i32
    return %arg0, %c0_i32, %c0_i32_0 : i32, i32, i32
  }
}

</mosaic_0001>

<llo_original>
// kernel: tpu_custom_call.1
$region0: #{tpu_custom_call.1}
  #allocation0 [shape = 'u32[]', space=smem, size = 0x4, offset = 0x4, fixed_abs, tag = 'smem constant byte address 0x4 - core index']
  #allocation1 [shape = 'u32[72,128]{1,0:T(1,128)}', space=vmem, size = 0x9000, scoped, tag = 'internal scratch']
  %s0 = inlined_call_operand.vmem [shape: f32[16,16], index: 0, kind: input, shape index: {}]
  %s1 = inlined_call_operand.vmem [shape: f32[2,16,8], index: 1, kind: input, shape index: {}]
  %s2 = inlined_call_operand.vmem [shape: f32[2,16,8], index: 2, kind: output, shape index: {}]
  %s3 = sld [smem:[#allocation0]]
  $region18: #{tpu_custom_call.1} parent=0
    _
  %s5 = ssub.s32 1, %s3
  %s6 = scalar_select 0, %s5, %s3
  // Predicated region
  $region2: #{tpu_custom_call.1} parent=0 // pred_check
    _
  $region3: #{tpu_custom_call.1} parent=0 // pred_check_branch
    %8 = sbr.rel (0) target = $region5
  $region4: #{tpu_custom_call.1} parent=0 // pred_region
    _
  $region5: #{tpu_custom_call.1} parent=0 // pred_fallthru
    _
  // Predicated region
  $region6: #{tpu_custom_call.1} parent=0 // pred_check
    _
  $region7: #{tpu_custom_call.1} parent=0 // pred_check_branch
    %10 = sbr.rel (0) target = $region9
  $region8: #{tpu_custom_call.1} parent=0 // pred_region
    _
  $region9: #{tpu_custom_call.1} parent=0 // pred_fallthru
    _
  %v11 = vld [vmem:[%s0] sm:$0xff]
  %v12 = vld [vmem:[%s0 + $0x8] sm:$0xff]
  %v13 = vld [vmem:[%s1] sm:$0xff]
  %v14 = vld [vmem:[%s1 + $0x8] sm:$0xff]
  %vm15 = vcmask 130048
  %v17 = vsel %vm15, %v11, 0
  %v20 = vsel %vm15, %v12, 0
  %22 = vmatpush.msra.mxu0 0.0
  %23 = vmatpush.msra.mxu0 0.0
  %24 = vmatpush.msra.mxu0 0.0
  %25 = vmatpush.msra.mxu0 0.0
  %26 = vmatpush.msra.mxu0 0.0
  %27 = vmatpush.msra.mxu0 0.0
  %28 = vmatpush.msra.mxu0 0.0
  %29 = vmatpush.msra.mxu0 0.0
  %30 = vmatpush.msra.mxu0 0.0
  %31 = vmatpush.msra.mxu0 0.0
  %32 = vmatpush.msra.mxu0 0.0
  %33 = vmatpush.msra.mxu0 0.0
  %34 = vmatpush.msra.mxu0 0.0
  %35 = vmatpush.msra.mxu0 0.0
  %36 = vmatpush.msra.mxu0 %v14
  %37 = vmatpush.msra.mxu0 %v13
  %38 = vmatmul.f32.gmra.mxu0 %v17
  %v39 = vpop.f32.mrf.mxu0
  %v40 = vadd.f32 0.0, %v39
  %41 = vmatmul.f32.gmra.mxu0 %v20
  %v42 = vpop.f32.mrf.mxu0
  %v43 = vadd.f32 0.0, %v42
  %44 = vdwg.mxu0
  %vm45 = vcmask 64512
  %46 = vst.msk [vmem:[%s2] sm:$0xff] %vm45, %v40
  %47 = vst.msk [vmem:[%s2 + $0x8] sm:$0xff] %vm45, %v43
  %s48 = scalar_lea.vmem %s1, 16
  %v49 = vld [vmem:[%s48] sm:$0xff]
  %v50 = vld [vmem:[%s48 + $0x8] sm:$0xff]
  %51 = vmatpush.msra.mxu0 0.0
  %52 = vmatpush.msra.mxu0 0.0
  %53 = vmatpush.msra.mxu0 0.0
  %54 = vmatpush.msra.mxu0 0.0
  %55 = vmatpush.msra.mxu0 0.0
  %56 = vmatpush.msra.mxu0 0.0
  %57 = vmatpush.msra.mxu0 0.0
  %58 = vmatpush.msra.mxu0 0.0
  %59 = vmatpush.msra.mxu0 0.0
  %60 = vmatpush.msra.mxu0 0.0
  %61 = vmatpush.msra.mxu0 0.0
  %62 = vmatpush.msra.mxu0 0.0
  %63 = vmatpush.msra.mxu0 0.0
  %64 = vmatpush.msra.mxu0 0.0
  %65 = vmatpush.msra.mxu0 %v50
  %66 = vmatpush.msra.mxu0 %v49
  %67 = vmatmul.f32.gmra.mxu0 %v17
  %v68 = vpop.f32.mrf.mxu0
  %v69 = vadd.f32 0.0, %v68
  %70 = vmatmul.f32.gmra.mxu0 %v20
  %v71 = vpop.f32.mrf.mxu0
  %v72 = vadd.f32 0.0, %v71
  %73 = vdwg.mxu0
  %s74 = scalar_lea.vmem %s2, 16
  %75 = vst.msk [vmem:[%s74] sm:$0xff] %vm45, %v69
  %76 = vst.msk [vmem:[%s74 + $0x8] sm:$0xff] %vm45, %v72
  // Predicated region
  $region10: #{tpu_custom_call.1} parent=0 // pred_check
    _
  $region11: #{tpu_custom_call.1} parent=0 // pred_check_branch
    %78 = sbr.rel (0) target = $region13
  $region12: #{tpu_custom_call.1} parent=0 // pred_region
    _
  $region13: #{tpu_custom_call.1} parent=0 // pred_fallthru
    _
  // Predicated region
  $region14: #{tpu_custom_call.1} parent=0 // pred_check
    _
  $region15: #{tpu_custom_call.1} parent=0 // pred_check_branch
    %80 = sbr.rel (0) target = $region17
  $region16: #{tpu_custom_call.1} parent=0 // pred_region
    _
  $region17: #{tpu_custom_call.1} parent=0 // pred_fallthru
    _

</llo_original>
